<compile_context>
chip_gen: v7x
topology: tpu7x:2x2x1
jax: 0.10.0
libtpu: 0.0.40
codegen_flags: <defaults>
</compile_context>

<pallas_src>
import functools

import jax
import jax.numpy as jnp
from jax import lax
from jax.experimental import pallas as pl
from jax.experimental.pallas import tpu as pltpu

BN_EPS = 1e-5


# --------------------------------------------------------------------------
# Kernels
# --------------------------------------------------------------------------
def _linear_stats_kernel(x_ref, wt_ref, s_ref, q_ref, *, n_rows, mask_tail):
    """Per batch tile: y = x @ W.T (bf16 MXU, f32 acc); emit partial stats."""
    x = x_ref[...]
    y = jnp.dot(x.astype(jnp.bfloat16), wt_ref[...],
                preferred_element_type=jnp.float32)           # (tn, C) f32

    if mask_tail:
        tn = x_ref.shape[0]
        row = pl.program_id(0) * tn + lax.broadcasted_iota(jnp.int32, (tn, 1), 0)
        y = jnp.where(row < n_rows, y, 0.0)                   # drop padded rows

    c = y.shape[1]
    ts = jnp.sum(y, axis=0, keepdims=True)                    # (1, C)
    tq = jnp.sum(y * y, axis=0, keepdims=True)                # (1, C)
    # Partial-sum blocks are (1, 8, C); broadcast along the sublane axis.
    s_ref[...] = jnp.broadcast_to(ts.reshape(1, 1, c), s_ref.shape)
    q_ref[...] = jnp.broadcast_to(tq.reshape(1, 1, c), q_ref.shape)


def _residual_stats_kernel(x_ref, wt_ref, scale_ref, shift_ref,
                           zp_ref, s_ref, q_ref, *, n_rows, mask_tail):
    """Per batch tile: recompute y, z_pre = x + relu(BN1(y)); emit stats."""
    x = x_ref[...]
    y = jnp.dot(x.astype(jnp.bfloat16), wt_ref[...],
                preferred_element_type=jnp.float32)           # (tn, C) f32
    y_bn = y * scale_ref[...] + shift_ref[...]                # BN1 folded
    zp = x + jnp.maximum(y_bn, 0.0)                           # residual add (f32)
    zp_ref[...] = zp.astype(zp_ref.dtype)                     # bf16 store to HBM

    if mask_tail:
        tn = x_ref.shape[0]
        row = pl.program_id(0) * tn + lax.broadcasted_iota(jnp.int32, (tn, 1), 0)
        zp = jnp.where(row < n_rows, zp, 0.0)

    c = zp.shape[1]
    ts = jnp.sum(zp, axis=0, keepdims=True)
    tq = jnp.sum(zp * zp, axis=0, keepdims=True)
    s_ref[...] = jnp.broadcast_to(ts.reshape(1, 1, c), s_ref.shape)
    q_ref[...] = jnp.broadcast_to(tq.reshape(1, 1, c), q_ref.shape)


def _affine_kernel(zp_ref, scale_ref, shift_ref, o_ref):
    """Per batch tile: z = z_pre * scale + shift (second BatchNorm, f32 math)."""
    zp = zp_ref[...].astype(jnp.float32)
    o_ref[...] = (zp * scale_ref[...] + shift_ref[...]).astype(o_ref.dtype)


# --------------------------------------------------------------------------
# Wrapper helpers
# --------------------------------------------------------------------------
def _vmem_limit_bytes():
    """Adaptive scoped-VMEM limit: ~75% of physical, capped (v7x-safe)."""
    try:
        cap = int(pltpu.get_tpu_info().vmem_capacity_bytes)
    except Exception:
        cap = 128 * 1024 * 1024
    return max(32 * 1024 * 1024, min((cap * 3) // 4, 96 * 1024 * 1024))


def _pick_batch_tile(n, c, vmem_limit):
    """Largest batch tile (multiple of 8, or full N) that fits the VMEM budget."""
    # Heaviest pass (pass 2) per-row cost: double-buffered f32 x tile (8c B)
    # + double-buffered bf16 z_pre tile (4c B); leave room for the resident
    # bf16 weight (counted twice to be safe re: buffering).
    per_row = 12 * c
    budget = (vmem_limit * 3) // 5 - 4 * c * c
    cap = budget // per_row if budget > 0 else 8
    cap = max(min(cap, 2048), 8)
    if n <= cap:
        return n                       # single / full-extent tile
    return max(cap - cap % 8, 8)


def _bn_scale_shift(s_part, q_part, n, gamma, beta):
    """Reduce per-tile partial sums, fold stats + affine into scale/shift."""
    s = jnp.sum(s_part[:, 0, :], axis=0, keepdims=True)    # (1, C)
    q = jnp.sum(q_part[:, 0, :], axis=0, keepdims=True)    # (1, C)
    mean = s / n
    var = jnp.maximum(q / n - mean * mean, 0.0)             # biased var (training BN)
    scale = gamma * lax.rsqrt(var + BN_EPS)
    shift = beta - mean * scale
    return scale, shift


# --------------------------------------------------------------------------
# Forward
# --------------------------------------------------------------------------
def res_linear_braid_forward(x, w, gamma1, beta1, gamma2, beta2, *,
                             batch_tile=None):
    """Forward of ResLinearBraidBlock with training-mode BatchNorm statistics.

    x: (N, C);  w: (C, C) WLinear weight (out_features, in_features);
    gamma*/beta*: (C,) affine params of the two WBatchNorm1d layers.
    """
    n, c = x.shape
    assert w.shape == (c, c), "channel_in must equal channel_out"

    f32 = jnp.float32
    bf16 = jnp.bfloat16

    vmem_limit = _vmem_limit_bytes()
    tn = batch_tile if batch_tile is not None else _pick_batch_tile(n, c, vmem_limit)
    tn = min(tn, n)
    if tn < n:
        assert tn % 8 == 0, "batch tile must be a multiple of 8 (or full N)"
    nt = pl.cdiv(n, tn)
    mask_tail = (n % tn) != 0

    # Parameter-sized one-time transpose + cast (feeds the MXU in bf16).
    wt = w.T.astype(bf16)                                   # (C_in, C_out)
    g1 = gamma1.reshape(1, c).astype(f32)
    b1 = beta1.reshape(1, c).astype(f32)
    g2 = gamma2.reshape(1, c).astype(f32)
    b2 = beta2.reshape(1, c).astype(f32)

    tile_spec = pl.BlockSpec((tn, c), lambda i: (i, 0))     # batch-tiled activations
    vec_spec = pl.BlockSpec((1, c), lambda i: (0, 0))       # resident (1, C) vectors
    weight_spec = pl.BlockSpec((c, c), lambda i: (0, 0))    # resident weight block
    stat_spec = pl.BlockSpec((1, 8, c), lambda i: (i, 0, 0))  # per-tile partial sums
    stat_shape = jax.ShapeDtypeStruct((nt, 8, c), f32)

    # Every grid axis is truly parallel (no carried accumulators) -> megacore
    # shards the stats passes too on multi-TensorCore chips.
    params = pltpu.CompilerParams(
        dimension_semantics=("parallel",),
        vmem_limit_bytes=vmem_limit)

    # Pass 1: BN1 statistics of y = x @ W.T (y itself never touches HBM).
    kern1 = functools.partial(_linear_stats_kernel, n_rows=n, mask_tail=mask_tail)
    s1, q1 = pl.pallas_call(
        kern1,
        grid=(nt,),
        in_specs=[tile_spec, weight_spec],
        out_specs=[stat_spec, stat_spec],
        out_shape=[stat_shape, stat_shape],
        compiler_params=params,
    )(x, wt)
    scale1, shift1 = _bn_scale_shift(s1, q1, n, g1, b1)

    # Pass 2: recompute y, apply BN1 + relu + residual, store z_pre (bf16),
    # accumulate BN2 statistics.
    kern2 = functools.partial(_residual_stats_kernel, n_rows=n, mask_tail=mask_tail)
    z_pre, s2, q2 = pl.pallas_call(
        kern2,
        grid=(nt,),
        in_specs=[tile_spec, weight_spec, vec_spec, vec_spec],
        out_specs=[tile_spec, stat_spec, stat_spec],
        out_shape=[jax.ShapeDtypeStruct((n, c), bf16), stat_shape, stat_shape],
        compiler_params=params,
    )(x, wt, scale1, shift1)
    scale2, shift2 = _bn_scale_shift(s2, q2, n, g2, b2)

    # Pass 3: apply BN2 (one FMA per element, f32 math, output in x.dtype).
    # (input_output_aliases not used: z_pre is bf16, output is x.dtype.)
    z = pl.pallas_call(
        _affine_kernel,
        grid=(nt,),
        in_specs=[tile_spec, vec_spec, vec_spec],
        out_specs=tile_spec,
        out_shape=jax.ShapeDtypeStruct((n, c), x.dtype),
        compiler_params=params,
    )(z_pre, scale2, shift2)
    return z


# --------------------------------------------------------------------------
# Pure-JAX reference of the PyTorch forward (training-mode BatchNorm, f32).
# --------------------------------------------------------------------------
def _reference(x, w, gamma1, beta1, gamma2, beta2):
    y = jnp.dot(x, w.T, precision=lax.Precision.HIGHEST)
    m1 = jnp.mean(y, axis=0, keepdims=True)
    v1 = jnp.mean((y - m1) ** 2, axis=0, keepdims=True)
    y = (y - m1) / jnp.sqrt(v1 + BN_EPS) * gamma1 + beta1
    y = jnp.maximum(y, 0.0)
    z = x + y
    m2 = jnp.mean(z, axis=0, keepdims=True)
    v2 = jnp.mean((z - m2) ** 2, axis=0, keepdims=True)
    z = (z - m2) / jnp.sqrt(v2 + BN_EPS) * gamma2 + beta2
    return z


if __name__ == "__main__":
    # channel_in == channel_out (module raises otherwise). C chosen as a
    # multiple of 128 so activation blocks are lane-dense (unmasked stores).
    N, C = 16, 128

    key = jax.random.PRNGKey(0)
    kx, kw, kg1, kb1, kg2, kb2, kx2 = jax.random.split(key, 7)
    x = jax.random.normal(kx, (N, C), dtype=jnp.float32)
    w = jax.random.normal(kw, (C, C), dtype=jnp.float32) / jnp.sqrt(C)
    gamma1 = 1.0 + 0.1 * jax.random.normal(kg1, (C,), dtype=jnp.float32)
    beta1 = 0.1 * jax.random.normal(kb1, (C,), dtype=jnp.float32)
    gamma2 = 1.0 + 0.1 * jax.random.normal(kg2, (C,), dtype=jnp.float32)
    beta2 = 0.1 * jax.random.normal(kb2, (C,), dtype=jnp.float32)

    # Tolerances are bf16-scale: bf16 MXU operands + bf16 z_pre storage give
    # ~1-2e-2 max abs deviation vs the f32 HIGHEST-precision reference.
    ATOL = RTOL = 5e-2

    # Case 1: batch_tile=8 -> 2 grid steps (exercises the per-tile partial
    # statistics path and the resident-weight reuse across tiles).
    out = res_linear_braid_forward(x, w, gamma1, beta1, gamma2, beta2,
                                   batch_tile=8)
    out = jax.block_until_ready(out)
    ref = _reference(x, w, gamma1, beta1, gamma2, beta2)
    assert out.shape == (N, C), out.shape
    err = float(jnp.max(jnp.abs(out - ref)))
    assert jnp.allclose(out, ref, atol=ATOL, rtol=RTOL), err

    # Case 2: ragged batch (N=20, tile=8 -> cdiv grid of 3 with a masked tail).
    N2 = 20
    x2 = jax.random.normal(kx2, (N2, C), dtype=jnp.float32)
    out2 = res_linear_braid_forward(x2, w, gamma1, beta1, gamma2, beta2,
                                    batch_tile=8)
    out2 = jax.block_until_ready(out2)
    ref2 = _reference(x2, w, gamma1, beta1, gamma2, beta2)
    assert out2.shape == (N2, C), out2.shape
    err2 = float(jnp.max(jnp.abs(out2 - ref2)))
    assert jnp.allclose(out2, ref2, atol=ATOL, rtol=RTOL), err2

    print("KERNEL_OK")
</pallas_src>

<mosaic_0001>
module attributes {stable_mosaic.version = 11 : i64} {
  func.func @_linear_stats_kernel(%arg0: i32, %arg1: memref<8x128xf32, #tpu.memory_space<vmem>>, %arg2: memref<128x128xbf16, #tpu.memory_space<vmem>>, %arg3: memref<1x8x128xf32, #tpu.memory_space<vmem>>, %arg4: memref<1x8x128xf32, #tpu.memory_space<vmem>>) attributes {dimension_semantics = [#tpu.dimension_semantics<parallel>], iteration_bounds = array<i64: 2>, scalar_prefetch = 0 : i64, scratch_operands = 0 : i64, tpu.core_type = #tpu.core_type<tc>, window_params = [{transform_indices = @transform_0, window_bounds = array<i64: 8, 128>}, {pipeline_mode = #tpu.pipeline_mode<synchronous>, transform_indices = @transform_1, window_bounds = array<i64: 128, 128>}, {transform_indices = @transform_2, window_bounds = array<i64: 1, 8, 128>}, {transform_indices = @transform_3, window_bounds = array<i64: 1, 8, 128>}]} {
    %c0 = arith.constant 0 : index
    %c0_0 = arith.constant 0 : index
    %0 = vector.load %arg1[%c0, %c0_0] : memref<8x128xf32, #tpu.memory_space<vmem>>, vector<8x128xf32>
    %1 = arith.truncf %0 : vector<8x128xf32> to vector<8x128xbf16>
    %c0_1 = arith.constant 0 : index
    %c0_2 = arith.constant 0 : index
    %2 = vector.load %arg2[%c0_1, %c0_2] : memref<128x128xbf16, #tpu.memory_space<vmem>>, vector<128x128xbf16>
    %cst = arith.constant dense<0.000000e+00> : vector<8x128xf32>
    %3 = tpu.matmul %1, %2, %cst {dimension_numbers = #tpu.dot_dimension_numbers<[1], [0], [0], [1], [0, 0, 1, 1], [], []>} : vector<8x128xbf16>, vector<128x128xbf16>, vector<8x128xf32> -> vector<8x128xf32>
    %cst_3 = arith.constant dense<0.000000e+00> : vector<128xf32>
    %4 = vector.multi_reduction <add>, %3, %cst_3 [0] : vector<8x128xf32> to vector<128xf32>
    %5 = vector.shape_cast %4 : vector<128xf32> to vector<1x128xf32>
    %6 = arith.mulf %3, %3 : vector<8x128xf32>
    %cst_4 = arith.constant dense<0.000000e+00> : vector<128xf32>
    %7 = vector.multi_reduction <add>, %6, %cst_4 [0] : vector<8x128xf32> to vector<128xf32>
    %8 = vector.shape_cast %7 : vector<128xf32> to vector<1x128xf32>
    %9 = vector.shape_cast %5 : vector<1x128xf32> to vector<1x1x128xf32>
    %10 = vector.shape_cast %9 : vector<1x1x128xf32> to vector<1x1x128xf32>
    %11 = vector.broadcast %10 : vector<1x1x128xf32> to vector<1x8x128xf32>
    %c0_5 = arith.constant 0 : index
    %c0_6 = arith.constant 0 : index
    %c0_7 = arith.constant 0 : index
    %12 = vector.load %arg3[%c0_5, %c0_6, %c0_7] : memref<1x8x128xf32, #tpu.memory_space<vmem>>, vector<1x8x128xf32>
    tpu.vector_store %arg3[%c0_5, %c0_6, %c0_7], %11 {strides = array<i32>} : memref<1x8x128xf32, #tpu.memory_space<vmem>>, vector<1x8x128xf32>,
    %13 = vector.shape_cast %8 : vector<1x128xf32> to vector<1x1x128xf32>
    %14 = vector.shape_cast %13 : vector<1x1x128xf32> to vector<1x1x128xf32>
    %15 = vector.broadcast %14 : vector<1x1x128xf32> to vector<1x8x128xf32>
    %c0_8 = arith.constant 0 : index
    %c0_9 = arith.constant 0 : index
    %c0_10 = arith.constant 0 : index
    %16 = vector.load %arg4[%c0_8, %c0_9, %c0_10] : memref<1x8x128xf32, #tpu.memory_space<vmem>>, vector<1x8x128xf32>
    tpu.vector_store %arg4[%c0_8, %c0_9, %c0_10], %15 {strides = array<i32>} : memref<1x8x128xf32, #tpu.memory_space<vmem>>, vector<1x8x128xf32>,
    return
  }
  func.func @transform_0(%arg0: i32) -> (i32, i32) {
    %c0_i32 = arith.constant 0 : i32
    %c0_i32_0 = arith.constant 0 : i32
    return %arg0, %c0_i32 : i32, i32
  }
  func.func @transform_1(%arg0: i32) -> (i32, i32) {
    %c0_i32 = arith.constant 0 : i32
    %c0_i32_0 = arith.constant 0 : i32
    %c0_i32_1 = arith.constant 0 : i32
    return %c0_i32, %c0_i32_0 : i32, i32
  }
  func.func @transform_2(%arg0: i32) -> (i32, i32, i32) {
    %c0_i32 = arith.constant 0 : i32
    %c0_i32_0 = arith.constant 0 : i32
    %c0_i32_1 = arith.constant 0 : i32
    return %arg0, %c0_i32, %c0_i32_0 : i32, i32, i32
  }
  func.func @transform_3(%arg0: i32) -> (i32, i32, i32) {
    %c0_i32 = arith.constant 0 : i32
    %c0_i32_0 = arith.constant 0 : i32
    %c0_i32_1 = arith.constant 0 : i32
    return %arg0, %c0_i32, %c0_i32_0 : i32, i32, i32
  }
}

</mosaic_0001>

<llo_original>
// kernel: tpu_custom_call.1
$region0: #{tpu_custom_call.1}
  #allocation0 [shape = 'u32[]', space=smem, size = 0x4, offset = 0x4, fixed_abs, tag = 'smem constant byte address 0x4 - core index']
  #allocation1 [shape = 'u32[144,128]{1,0:T(1,128)}', space=vmem, size = 0x12000, scoped, tag = 'internal scratch']
  %s0 = inlined_call_operand.hbm [shape: f32[16,128], index: 0, kind: input, shape index: {}]
  %s1 = inlined_call_operand.hbm [shape: bf16[128,128], index: 1, kind: input, shape index: {}]
  %s2 = inlined_call_operand.hbm [shape: f32[2,8,128], index: 2, kind: output, shape index: {0}]
  %s3 = inlined_call_operand.hbm [shape: f32[2,8,128], index: 3, kind: output, shape index: {1}]
  %4 = xla_tuple %s2, %s3
  %s5 = sld [smem:[#allocation0]]
  $region57: #{tpu_custom_call.1} parent=0
    _
  %s7 = ssub.s32 1, %s5
  %s8 = scalar_select 0, %s7, %s5
  $region1: #{tpu_custom_call.1} parent=0
    #allocation2 [shape = 'u8[8192]{0}', space=vmem, size = 0x2000, scoped, tag = 'input window, operand 0']
    #allocation3 [shape = 's32[2]{0}', space=sflag, size = 0x8, scoped, tag = 'scoped memory for tpu_custom_call.1']
    #allocation4 [shape = 's32[2]{0}', space=sflag, size = 0x8, scoped, tag = 'scoped memory for tpu_custom_call.1']
    #allocation5 [shape = 'u8[32768]{0}', space=vmem, size = 0x8000, scoped, tag = 'input window, operand 1, single buffered']
    #allocation6 [shape = 's32[1]{0}', space=sflag, size = 0x4, scoped, tag = 'scoped memory for tpu_custom_call.1']
    #allocation7 [shape = 'u8[8192]{0}', space=vmem, size = 0x2000, scoped, tag = 'output window, operand 0']
    #allocation8 [shape = 'u8[8192]{0}', space=vmem, size = 0x2000, scoped, tag = 'output window, operand 1']
    #allocation9 [shape = 's32[2]{0}', space=sflag, size = 0x8, scoped, tag = 'scoped memory for tpu_custom_call.1']
    %9 = vsyncpa [#allocation3], 0
    %s10 = scalar_lea.sflag [#allocation3], 1
    %11 = vsyncpa %s10, 0
    %12 = vsyncpa [#allocation6], 0
    %13 = vsyncpa [#allocation4], 0
    %s14 = scalar_lea.sflag [#allocation4], 1
    %15 = vsyncpa %s14, 0
    %16 = vsyncpa [#allocation9], 0
    %s17 = scalar_lea.sflag [#allocation9], 1
    %18 = vsyncpa %s17, 0
    loop: start=0, step=1, limit=4
    $region2: #{tpu_custom_call.1} parent=1 // loop_pre_header
      _
    $region3: #{tpu_custom_call.1} parent=1 // loop_header
      %s20 = sphi 0, %s24
      %p21 = scmp.ge.s32.totalorder %s20, 4
      %s30 = sphi 0, %s32
      %s33 = sphi 0, %s30
      %s34 = sphi 0, %s33
      %s50 = sphi 0, %s34
      %s54 = sphi 0, %s54
      %s56 = sphi 0, %s54
      %s57 = sphi 0, %s56
      %s71 = sphi 0, %s57
      %s77 = sphi 0, %s79
      %s80 = sphi 0, %s77
      %s81 = sphi 0, %s80
      %s97 = sphi 0, %s81
      %s103 = sphi 0, %s105
      %s106 = sphi 0, %s103
      %s107 = sphi 0, %s106
      %s123 = sphi 0, %s107
    $region4: #{tpu_custom_call.1} parent=1 // loop_header_branch
      %23 = sbr.rel (%p21) target = $region8
    $region5: #{tpu_custom_call.1} parent=1 // loop_body
      %s25 = ssub.s32 %s20, 1
      %s26 = ssub.s32 %s20, 2
      %s27 = sadd.s32 %s20, 1
      %s28 = ssub.s32 %s20, %s27
      %p29 = scmp.eq.s32.totalorder %s28, 0
      %s31 = sadd.s32 %s30, 1
      %s32 = scalar_select %p29, %s30, %s31
      %p35 = pneg %p29
      %p36 = scmp.eq.s32.totalorder %s20, 1
      %p37 = por %p35, %p36
      %p38 = scmp.ne.s32.totalorder %s30, %s33
      %p39 = scmp.eq.s32.totalorder %s20, 0
      %p40 = por %p38, %p39
      %p41 = scmp.ne.s32.totalorder %s30, %s33
      %p42 = scmp.eq.s32.totalorder %s25, 1
      %p43 = por %p41, %p42
      %p44 = scmp.ne.s32.totalorder %s33, %s34
      %p45 = scmp.eq.s32.totalorder %s25, 0
      %p46 = por %p44, %p45
      %p47 = scmp.ne.s32.totalorder %s33, %s34
      %p48 = scmp.eq.s32.totalorder %s26, 1
      %p49 = por %p47, %p48
      %p51 = scmp.ne.s32.totalorder %s34, %s50
      %p52 = scmp.eq.s32.totalorder %s26, 0
      %p53 = por %p51, %p52
      %s55 = sadd.s32 %s54, 1
      %p58 = scmp.eq.s32.totalorder %s20, 1
      %p59 = scmp.ne.s32.totalorder %s54, %s56
      %p60 = scmp.eq.s32.totalorder %s20, 0
      %p61 = por %p59, %p60
      %p62 = scmp.ne.s32.totalorder %s54, %s56
      %p63 = scmp.eq.s32.totalorder %s25, 1
      %p64 = por %p62, %p63
      %p65 = scmp.ne.s32.totalorder %s56, %s57
      %p66 = scmp.eq.s32.totalorder %s25, 0
      %p67 = por %p65, %p66
      %p68 = scmp.ne.s32.totalorder %s56, %s57
      %p69 = scmp.eq.s32.totalorder %s26, 1
      %p70 = por %p68, %p69
      %p72 = scmp.ne.s32.totalorder %s57, %s71
      %p73 = scmp.eq.s32.totalorder %s26, 0
      %p74 = por %p72, %p73
      %s75 = ssub.s32 %s20, %s27
      %p76 = scmp.eq.s32.totalorder %s75, 0
      %s78 = sadd.s32 %s77, 1
      %s79 = scalar_select %p76, %s77, %s78
      %p82 = pneg %p76
      %p83 = scmp.eq.s32.totalorder %s20, 1
      %p84 = por %p82, %p83
      %p85 = scmp.ne.s32.totalorder %s77, %s80
      %p86 = scmp.eq.s32.totalorder %s20, 0
      %p87 = por %p85, %p86
      %p88 = scmp.ne.s32.totalorder %s77, %s80
      %p89 = scmp.eq.s32.totalorder %s25, 1
      %p90 = por %p88, %p89
      %p91 = scmp.ne.s32.totalorder %s80, %s81
      %p92 = scmp.eq.s32.totalorder %s25, 0
      %p93 = por %p91, %p92
      %p94 = scmp.ne.s32.totalorder %s80, %s81
      %p95 = scmp.eq.s32.totalorder %s26, 1
      %p96 = por %p94, %p95
      %p98 = scmp.ne.s32.totalorder %s81, %s97
      %p99 = scmp.eq.s32.totalorder %s26, 0
      %p100 = por %p98, %p99
      %s101 = ssub.s32 %s20, %s27
      %p102 = scmp.eq.s32.totalorder %s101, 0
      %s104 = sadd.s32 %s103, 1
      %s105 = scalar_select %p102, %s103, %s104
      %p108 = pneg %p102
      %p109 = scmp.eq.s32.totalorder %s20, 1
      %p110 = por %p108, %p109
      %p111 = scmp.ne.s32.totalorder %s103, %s106
      %p112 = scmp.eq.s32.totalorder %s20, 0
      %p113 = por %p111, %p112
      %p114 = scmp.ne.s32.totalorder %s103, %s106
      %p115 = scmp.eq.s32.totalorder %s25, 1
      %p116 = por %p114, %p115
      %p117 = scmp.ne.s32.totalorder %s106, %s107
      %p118 = scmp.eq.s32.totalorder %s25, 0
      %p119 = por %p117, %p118
      %p120 = scmp.ne.s32.totalorder %s106, %s107
      %p121 = scmp.eq.s32.totalorder %s26, 1
      %p122 = por %p120, %p121
      %p124 = scmp.ne.s32.totalorder %s107, %s123
      %p125 = scmp.eq.s32.totalorder %s26, 0
      %p126 = por %p124, %p125
      %p127 = scmp.le.s32.totalorder 1, %s20
      %p128 = scmp.lt.s32.totalorder %s20, 3
      %p129 = pnand %p127, %p128
      %p130 = pneg %p129
      // Predicated region
      $region9: #{tpu_custom_call.1} parent=5 // pred_check
        _
      $region10: #{tpu_custom_call.1} parent=5 // pred_check_branch
        %132 = sbr.rel (%p129) target = $region12
      $region11: #{tpu_custom_call.1} parent=5 // pred_region
        %s133 = ssub.s32 %s20, 1
        // Predicated region
        $region13: #{tpu_custom_call.1} parent=11 // pred_check
          %p134 = pneg %p67
        $region14: #{tpu_custom_call.1} parent=11 // pred_check_branch
          %136 = sbr.rel (%p134) target = $region16
        $region15: #{tpu_custom_call.1} parent=11 // pred_region
          %s138 = ssub.s32 1024, 1024
          %139 = vsyncadd [#allocation6], %s138
          %s140 = sshll.u32 [#allocation5], 4
          %s141 = int_to_ptr.vmem [resolvable:$true] %s140
          %146 = dma.hbm_to_vmem [thread:$0]  %s1, 1024, %s141, [#allocation6], 64, 64, 4
        $region16: #{tpu_custom_call.1} parent=11 // pred_fallthru
          _
      $region12: #{tpu_custom_call.1} parent=5 // pred_fallthru
        _
      %p147 = scmp.lt.s32.totalorder %s20, 2
      // Predicated region
      $region17: #{tpu_custom_call.1} parent=5 // pred_check
        %p148 = pneg %p147
      $region18: #{tpu_custom_call.1} parent=5 // pred_check_branch
        %150 = sbr.rel (%p148) target = $region20
      $region19: #{tpu_custom_call.1} parent=5 // pred_region
        // Predicated region
        $region21: #{tpu_custom_call.1} parent=19 // pred_check
          %p151 = pneg %p40
        $region22: #{tpu_custom_call.1} parent=19 // pred_check_branch
          %153 = sbr.rel (%p151) target = $region24
        $region23: #{tpu_custom_call.1} parent=19 // pred_region
          %s154 = sand.u32 %s30, 1
          %s155 = scalar_lea.sflag [#allocation3], %s154
          %s156 = sand.u32 %s30, 1
          %s157 = smul.addr %s156, 8
          %s158 = scalar_lea.vmem [#allocation2], %s157
          %s160 = ssub.s32 128, 128
          %161 = vsyncadd %s155, %s160
          %s162 = smul.addr %s20, 128
          %s163 = scalar_lea.hbm %s0, %s162
          %s165 = sshll.u32 %s158, 4
          %s166 = int_to_ptr.vmem [resolvable:$true] %s165
          %168 = dma.hbm_to_vmem [thread:$0]  %s163, 128, %s166, %s155
        $region24: #{tpu_custom_call.1} parent=19 // pred_fallthru
          _
      $region20: #{tpu_custom_call.1} parent=5 // pred_fallthru
        _
      %p169 = scmp.le.s32.totalorder 1, %s20
      %p170 = scmp.lt.s32.totalorder %s20, 3
      %p171 = pnand %p169, %p170
      %p172 = pneg %p171
      // Predicated region
      $region25: #{tpu_custom_call.1} parent=5 // pred_check
        _
      $region26: #{tpu_custom_call.1} parent=5 // pred_check_branch
        %174 = sbr.rel (%p171) target = $region28
      $region27: #{tpu_custom_call.1} parent=5 // pred_region
        %s175 = ssub.s32 %s20, 1
        %s176 = sand.u32 %s33, 1
        %s177 = scalar_lea.sflag [#allocation3], %s176
        %s178 = sand.u32 %s33, 1
        %s179 = smul.addr %s178, 8
        %s180 = scalar_lea.vmem [#allocation2], %s179
        // Predicated region
        $region29: #{tpu_custom_call.1} parent=27 // pred_check
          %p181 = pneg %p46
        $region30: #{tpu_custom_call.1} parent=27 // pred_check_branch
          %183 = sbr.rel (%p181) target = $region32
        $region31: #{tpu_custom_call.1} parent=27 // pred_region
          %184 = dma.done %s177, 128
        $region32: #{tpu_custom_call.1} parent=27 // pred_fallthru
          _
        // Predicated region
        $region33: #{tpu_custom_call.1} parent=27 // pred_check
          %p185 = pneg %p67
        $region34: #{tpu_custom_call.1} parent=27 // pred_check_branch
          %187 = sbr.rel (%p185) target = $region36
        $region35: #{tpu_custom_call.1} parent=27 // pred_region
          %188 = dma.done [#allocation6], 1024
        $region36: #{tpu_custom_call.1} parent=27 // pred_fallthru
          _
        %s189 = sand.u32 %s33, 1
        %s190 = scalar_lea.sflag [#allocation3], %s189
        %s191 = sand.u32 %s33, 1
        %s192 = smul.addr %s191, 8
        %s193 = scalar_lea.vmem [#allocation2], %s192
        %p194 = pneg %p46
        %p195 = pneg %p43
        %p196 = pneg %p67
        %p197 = pneg %p64
        %p198 = pneg %p93
        %p199 = pneg %p90
        %s200 = sand.u32 %s80, 1
        %s201 = scalar_lea.sflag [#allocation4], %s200
        %s202 = sand.u32 %s80, 1
        %s203 = smul.addr %s202, 8
        %s204 = scalar_lea.vmem [#allocation7], %s203
        %p205 = pneg %p119
        %p206 = pneg %p116
        %s207 = sand.u32 %s106, 1
        %s208 = scalar_lea.sflag [#allocation9], %s207
        %s209 = sand.u32 %s106, 1
        %s210 = smul.addr %s209, 8
        %s211 = scalar_lea.vmem [#allocation8], %s210
        %v213 = vld [vmem:[%s180] sm:$0xff]
        %v214 = vpack.c.bf16 %v213, %v213
        %v215 = vld [vmem:[#allocation5] sm:$0xf]
        %v216 = vld [vmem:[#allocation5 + $0x4] sm:$0xf]
        %v217 = vld [vmem:[#allocation5 + $0x8] sm:$0xf]
        %v218 = vld [vmem:[#allocation5 + $0xc] sm:$0xf]
        %v219 = vld [vmem:[#allocation5 + $0x10] sm:$0xf]
        %v220 = vld [vmem:[#allocation5 + $0x14] sm:$0xf]
        %v221 = vld [vmem:[#allocation5 + $0x18] sm:$0xf]
        %v222 = vld [vmem:[#allocation5 + $0x1c] sm:$0xf]
        %v223 = vld [vmem:[#allocation5 + $0x20] sm:$0xf]
        %v224 = vld [vmem:[#allocation5 + $0x24] sm:$0xf]
        %v225 = vld [vmem:[#allocation5 + $0x28] sm:$0xf]
        %v226 = vld [vmem:[#allocation5 + $0x2c] sm:$0xf]
        %v227 = vld [vmem:[#allocation5 + $0x30] sm:$0xf]
        %v228 = vld [vmem:[#allocation5 + $0x34] sm:$0xf]
        %v229 = vld [vmem:[#allocation5 + $0x38] sm:$0xf]
        %v230 = vld [vmem:[#allocation5 + $0x3c] sm:$0xf]
        %v247 = vunpack.c.l.b16 %v215
        %v248 = vunpack.c.l.b16 %v216
        %v249 = vunpack.c.l.b16 %v217
        %v250 = vunpack.c.l.b16 %v218
        %v251 = vunpack.c.l.b16 %v219
        %v252 = vunpack.c.l.b16 %v220
        %v253 = vunpack.c.l.b16 %v221
        %v254 = vunpack.c.l.b16 %v222
        %v255 = vunpack.c.l.b16 %v223
        %v256 = vunpack.c.l.b16 %v224
        %v257 = vunpack.c.l.b16 %v225
        %v258 = vunpack.c.l.b16 %v226
        %v259 = vunpack.c.l.b16 %v227
        %v260 = vunpack.c.l.b16 %v228
        %v261 = vunpack.c.l.b16 %v229
        %v262 = vunpack.c.l.b16 %v230
        %v263 = vpack.c.b16 %v248, %v247
        %v264 = vpack.c.b16 %v250, %v249
        %v265 = vpack.c.b16 %v252, %v251
        %v266 = vpack.c.b16 %v254, %v253
        %v267 = vpack.c.b16 %v256, %v255
        %v268 = vpack.c.b16 %v258, %v257
        %v269 = vpack.c.b16 %v260, %v259
        %v270 = vpack.c.b16 %v262, %v261
        %279 = vmatprep.subr.bf16.mxu0 0
        %280 = vmatpush1.bf16.msra.mxu0 %v263
        %281 = vmatprep.subr.bf16.mxu0 0
        %282 = vmatpush1.bf16.msra.mxu0 %v264
        %283 = vmatprep.subr.bf16.mxu0 0
        %284 = vmatpush1.bf16.msra.mxu0 %v265
        %285 = vmatprep.subr.bf16.mxu0 0
        %286 = vmatpush1.bf16.msra.mxu0 %v266
        %287 = vmatprep.subr.bf16.mxu0 0
        %288 = vmatpush1.bf16.msra.mxu0 %v267
        %289 = vmatprep.subr.bf16.mxu0 0
        %290 = vmatpush1.bf16.msra.mxu0 %v268
        %291 = vmatprep.subr.bf16.mxu0 0
        %292 = vmatpush1.bf16.msra.mxu0 %v269
        %293 = vmatprep.subr.bf16.mxu0 0
        %294 = vmatpush1.bf16.msra.mxu0 %v270
        %295 = vmatprep.subr.bf16.mxu0 0
        %296 = vmatpush1.bf16.msra.mxu0 0
        %297 = vmatprep.subr.bf16.mxu0 0
        %298 = vmatpush1.bf16.msra.mxu0 0
        %299 = vmatprep.subr.bf16.mxu0 0
        %300 = vmatpush1.bf16.msra.mxu0 0
        %301 = vmatprep.subr.bf16.mxu0 0
        %302 = vmatpush1.bf16.msra.mxu0 0
        %303 = vmatprep.subr.bf16.mxu0 0
        %304 = vmatpush1.bf16.msra.mxu0 0
        %305 = vmatprep.subr.bf16.mxu0 0
        %306 = vmatpush1.bf16.msra.mxu0 0
        %307 = vmatprep.subr.bf16.mxu0 0
        %308 = vmatpush1.bf16.msra.mxu0 0
        %309 = vmatprep.subr.bf16.mxu0 0
        %310 = vmatpush1.bf16.msra.mxu0 0
        %311 = vmatprep.mubr.bf16.mxu0 0
        %312 = vmatmul.mubr.bf16.gmra.mrb[0].mxu0 %v214
        %v313 = vpop.f32.mrb[0].mxu0
        %v314 = vadd.f32 0.0, %v313
        %v315 = vpop.f32.mrb[0].mxu0
        %v316 = vpop.f32.mrb[0].mxu0
        %v317 = vpop.f32.mrb[0].mxu0
        %318 = vdwg.mxu0
        %v319 = vrot.slane %v314, 4
        %v320 = vadd.f32 %v314, %v319
        %v321 = vrot.slane %v320, 2
        %v322 = vadd.f32 %v320, %v321
        %v323 = vrot.slane %v322, 1
        %v324 = vadd.f32 %v322, %v323
        %v325 = vmul.f32 %v314, %v314
        %v326 = vrot.slane %v325, 4
        %v327 = vadd.f32 %v325, %v326
        %v328 = vrot.slane %v327, 2
        %v329 = vadd.f32 %v327, %v328
        %v330 = vrot.slane %v329, 1
        %v331 = vadd.f32 %v329, %v330
        %332 = vst [vmem:[%s204] sm:$0xff] %v324
        %333 = vst [vmem:[%s211] sm:$0xff] %v331
        %s334 = sand.u32 %s80, 1
        %s335 = scalar_lea.sflag [#allocation4], %s334
        %s336 = sand.u32 %s80, 1
        %s337 = smul.addr %s336, 8
        %s338 = scalar_lea.vmem [#allocation7], %s337
        %s339 = sand.u32 %s106, 1
        %s340 = scalar_lea.sflag [#allocation9], %s339
        %s341 = sand.u32 %s106, 1
        %s342 = smul.addr %s341, 8
        %s343 = scalar_lea.vmem [#allocation8], %s342
        // Predicated region
        $region37: #{tpu_custom_call.1} parent=27 // pred_check
          %p344 = pneg %p90
        $region38: #{tpu_custom_call.1} parent=27 // pred_check_branch
          %346 = sbr.rel (%p344) target = $region40
        $region39: #{tpu_custom_call.1} parent=27 // pred_region
          %s348 = ssub.s32 128, 128
          %349 = vsyncadd %s335, %s348
          %s350 = smul.addr %s25, 128
          %s351 = scalar_lea.hbm %s2, %s350
          %s353 = sshll.u32 %s338, 4
          %s354 = int_to_ptr.vmem [resolvable:$true] %s353
          %356 = dma.vmem_to_hbm [thread:$0]  %s354, 128, %s351, %s335
        $region40: #{tpu_custom_call.1} parent=27 // pred_fallthru
          _
        // Predicated region
        $region41: #{tpu_custom_call.1} parent=27 // pred_check
          %p357 = pneg %p116
        $region42: #{tpu_custom_call.1} parent=27 // pred_check_branch
          %359 = sbr.rel (%p357) target = $region44
        $region43: #{tpu_custom_call.1} parent=27 // pred_region
          %s361 = ssub.s32 128, 128
          %362 = vsyncadd %s340, %s361
          %s363 = smul.addr %s25, 128
          %s364 = scalar_lea.hbm %s3, %s363
          %s366 = sshll.u32 %s343, 4
          %s367 = int_to_ptr.vmem [resolvable:$true] %s366
          %369 = dma.vmem_to_hbm [thread:$0]  %s367, 128, %s364, %s340
        $region44: #{tpu_custom_call.1} parent=27 // pred_fallthru
          _
      $region28: #{tpu_custom_call.1} parent=5 // pred_fallthru
        _
      %p370 = scmp.le.s32.totalorder 2, %s20
      // Predicated region
      $region45: #{tpu_custom_call.1} parent=5 // pred_check
        %p371 = pneg %p370
      $region46: #{tpu_custom_call.1} parent=5 // pred_check_branch
        %373 = sbr.rel (%p371) target = $region48
      $region47: #{tpu_custom_call.1} parent=5 // pred_region
        %s374 = ssub.s32 %s20, 2
        // Predicated region
        $region49: #{tpu_custom_call.1} parent=47 // pred_check
          %p375 = pneg %p96
        $region50: #{tpu_custom_call.1} parent=47 // pred_check_branch
          %377 = sbr.rel (%p375) target = $region52
        $region51: #{tpu_custom_call.1} parent=47 // pred_region
          %s378 = sand.u32 %s81, 1
          %s379 = scalar_lea.sflag [#allocation4], %s378
          %s380 = sand.u32 %s81, 1
          %s381 = smul.addr %s380, 8
          %s382 = scalar_lea.vmem [#allocation7], %s381
          %383 = dma.done %s379, 128
        $region52: #{tpu_custom_call.1} parent=47 // pred_fallthru
          _
        // Predicated region
        $region53: #{tpu_custom_call.1} parent=47 // pred_check
          %p384 = pneg %p122
        $region54: #{tpu_custom_call.1} parent=47 // pred_check_branch
          %386 = sbr.rel (%p384) target = $region56
        $region55: #{tpu_custom_call.1} parent=47 // pred_region
          %s387 = sand.u32 %s107, 1
          %s388 = scalar_lea.sflag [#allocation9], %s387
          %s389 = sand.u32 %s107, 1
          %s390 = smul.addr %s389, 8
          %s391 = scalar_lea.vmem [#allocation8], %s390
          %392 = dma.done %s388, 128
        $region56: #{tpu_custom_call.1} parent=47 // pred_fallthru
          _
      $region48: #{tpu_custom_call.1} parent=5 // pred_fallthru
        _
    $region6: #{tpu_custom_call.1} parent=1 // loop_footer
      %s24 = sadd.s32 1, %s20
    $region7: #{tpu_custom_call.1} parent=1 // loop_footer_branch
      %19 = sbr.rel target = $region3
    $region8: #{tpu_custom_call.1} parent=1 // loop_exit
      _
    %393 = vsyncpa [#allocation3], 1
    %s394 = scalar_lea.sflag [#allocation3], 1
    %395 = vsyncpa %s394, 1
    %396 = vsyncpa [#allocation6], 1
    %397 = vsyncpa [#allocation4], 1
    %s398 = scalar_lea.sflag [#allocation4], 1
    %399 = vsyncpa %s398, 1
    %400 = vsyncpa [#allocation9], 1
    %s401 = scalar_lea.sflag [#allocation9], 1
    %402 = vsyncpa %s401, 1

</llo_original>
